<compile_context>
chip_gen: v7x
topology: tpu7x:2x2x1
jax: 0.10.0
libtpu: 0.0.40
codegen_flags: <defaults>
</compile_context>

<pallas_src>
import jax
import jax.numpy as jnp
from jax.experimental import pallas as pl
from jax.experimental.pallas import tpu as pltpu


# --------------------------------------------------------------------------- #
# Kernel body
# --------------------------------------------------------------------------- #
def _linear_kernel(x_ref, w_ref, b_ref, o_ref):
    # x_ref: [TM, Kp] f32 (streamed), w_ref: [Kp, Np] f32 (resident),
    # b_ref: [1, Np] f32 (resident), o_ref: [TM, Np] f32.
    acc = jnp.dot(x_ref[...], w_ref[...], preferred_element_type=jnp.float32)
    # Epilogue stays on the f32 accumulator (safe on v5e: no bf16 VPU).
    o_ref[...] = (acc + b_ref[...]).astype(o_ref.dtype)


# --------------------------------------------------------------------------- #
# Tiling policy
# --------------------------------------------------------------------------- #
def _round_up(v, m):
    return ((v + m - 1) // m) * m


def _pick_tile_rows(n_rows, max_tile=2048, sublane=8):
    """Row-tile (in packed rows) for the activation matrix.

    Big tiles amortize the ~0.35us per-grid-step overhead (>=1 MB/step even
    at v7x HBM bandwidth); >=2 balanced steps let v7x shard the 'parallel'
    axis across its 2 TensorCores.  On v5e/v6e (1 TC) the split is harmless.
    """
    if n_rows <= 2 * sublane:
        return n_rows                                   # tiny: single full block
    if n_rows <= 2 * max_tile:
        return min(_round_up(pl.cdiv(n_rows, 2), sublane), n_rows)  # 2 balanced steps
    steps = _round_up(pl.cdiv(n_rows, max_tile), 2)     # even step count, each <= max_tile
    return _round_up(pl.cdiv(n_rows, steps), sublane)


# --------------------------------------------------------------------------- #
# Forward wrappers
# --------------------------------------------------------------------------- #
@jax.jit
def _decoder_ctc_pallas(x, weight_bd, bias_tiled):
    """x: [B,T,K] f32; weight_bd: [pack*K, pack*N]; bias_tiled: [1, pack*N]."""
    B, T, K = x.shape
    Kp, Np = weight_bd.shape
    pack = Kp // K
    N = Np // pack
    M = B * T

    rows = pl.cdiv(M, pack)        # packed rows
    m_pad = rows * pack

    x2d = x.reshape(M, K)
    if m_pad != M:                 # rare ragged case: pad rows (zeros -> masked away)
        x2d = jnp.pad(x2d, ((0, m_pad - M), (0, 0)))
    xp = x2d.reshape(rows, Kp)     # zero-copy row-major pack of 'pack' rows per row

    tile_rows = _pick_tile_rows(rows)
    grid = (pl.cdiv(rows, tile_rows),)

    cost = pl.CostEstimate(
        flops=2 * rows * Kp * Np,
        transcendentals=0,
        bytes_accessed=4 * (rows * Kp + Kp * Np + Np + rows * Np),
    )

    out_p = pl.pallas_call(
        _linear_kernel,
        out_shape=jax.ShapeDtypeStruct((rows, Np), x.dtype),
        grid_spec=pltpu.PrefetchScalarGridSpec(
            num_scalar_prefetch=0,
            grid=grid,
            in_specs=[
                # Row tile of activations: the only stream that changes per step.
                pl.BlockSpec((tile_rows, Kp), lambda i: (i, 0)),
                # Whole weight / bias: constant index_map -> fetched once,
                # resident in VMEM across grid steps.
                pl.BlockSpec((Kp, Np), lambda i: (0, 0)),
                pl.BlockSpec((1, Np), lambda i: (0, 0)),
            ],
            out_specs=pl.BlockSpec((tile_rows, Np), lambda i: (i, 0)),
        ),
        compiler_params=pltpu.CompilerParams(
            dimension_semantics=("parallel",),
        ),
        cost_estimate=cost,
    )(xp, weight_bd, bias_tiled)

    out = out_p.reshape(m_pad, N)
    if m_pad != M:
        out = out[:M]
    return out.reshape(B, T, N)


@jax.jit
def _decoder_ctc_xla(x, weight_t, bias):
    # Tiny-M fallback: dispatch + pipeline overhead would dominate a pallas_call.
    return x @ weight_t + bias


# --------------------------------------------------------------------------- #
# Module
# --------------------------------------------------------------------------- #
class DecoderCTC:
    """Minimal JAX mirror of Decoder(opt.Prediction == 'CTC')."""

    def __init__(self, in_features, num_class, key, *, min_pallas_rows=512):
        kw, kb = jax.random.split(key)
        bound = 1.0 / (in_features ** 0.5)
        self.in_features = in_features
        self.num_class = num_class
        self.min_pallas_rows = min_pallas_rows

        # nn.Linear default init: U(-1/sqrt(in), 1/sqrt(in)); PyTorch weight is
        # [num_class, in_features], stored transposed [in, out] for x @ W_t.
        self.weight_t = jax.random.uniform(
            kw, (in_features, num_class), jnp.float32, -bound, bound
        )
        self.bias = jax.random.uniform(
            kb, (num_class,), jnp.float32, -bound, bound
        )

        # Lane-dense packing factor: pack rows so the output last dim is exactly
        # 128 lanes (unmasked stores).  Falls back to 1 when 128 % num_class != 0.
        pack = 128 // num_class if (num_class <= 128 and 128 % num_class == 0) else 1
        self.pack = pack
        # Built once at init (no per-call re-tiling / re-casting).
        self.weight_bd = jnp.kron(
            jnp.eye(pack, dtype=jnp.float32), self.weight_t
        )                                                    # [pack*K, pack*N]
        self.bias_tiled = jnp.tile(self.bias, pack).reshape(1, pack * num_class)

    def __call__(self, x, text=None, is_train=True):
        # 'text'/'is_train' are unused in the CTC branch, matching PyTorch.
        B, T, _ = x.shape
        if B * T < self.min_pallas_rows:
            return _decoder_ctc_xla(x, self.weight_t, self.bias)
        return _decoder_ctc_pallas(x, self.weight_bd, self.bias_tiled)


# --------------------------------------------------------------------------- #
# Demo / self-test
# --------------------------------------------------------------------------- #
if __name__ == "__main__":
    key = jax.random.PRNGKey(0)
    k_in, k_in2, k_param = jax.random.split(key, 3)

    # Small shapes: batch=2, T=8 sequence steps, in_features=32, num_class=16.
    B, T, IN_FEAT, NUM_CLASS = 2, 8, 32, 16

    # min_pallas_rows=0 forces the Pallas path in the demo (normally tiny
    # inputs would be served by the plain XLA dot fallback).
    decoder = DecoderCTC(IN_FEAT, NUM_CLASS, k_param, min_pallas_rows=0)

    x = jax.random.normal(k_in, (B, T, IN_FEAT), jnp.float32)
    pred = decoder(x, text=None, is_train=True)
    pred = jax.block_until_ready(pred)
    assert pred.shape == (B, T, NUM_CLASS)

    ref = (x.reshape(-1, IN_FEAT) @ decoder.weight_t + decoder.bias).reshape(
        B, T, NUM_CLASS
    )
    assert jnp.allclose(pred, ref, atol=2e-2, rtol=2e-2), float(
        jnp.max(jnp.abs(pred - ref))
    )

    # Second (still small) case: ragged row count -> multi-step grid + row
    # padding path.  M = 3*113 = 339 (not a multiple of pack=8).
    B2, T2 = 3, 113
    x2 = jax.random.normal(k_in2, (B2, T2, IN_FEAT), jnp.float32)
    pred2 = jax.block_until_ready(decoder(x2))
    ref2 = (x2.reshape(-1, IN_FEAT) @ decoder.weight_t + decoder.bias).reshape(
        B2, T2, NUM_CLASS
    )
    assert pred2.shape == (B2, T2, NUM_CLASS)
    assert jnp.allclose(pred2, ref2, atol=2e-2, rtol=2e-2), float(
        jnp.max(jnp.abs(pred2 - ref2))
    )

    print("KERNEL_OK")
</pallas_src>

<mosaic_0001>
module attributes {stable_mosaic.version = 11 : i64} {
  func.func @_linear_kernel(%arg0: i32, %arg1: memref<2x256xf32, #tpu.memory_space<vmem>>, %arg2: memref<256x128xf32, #tpu.memory_space<vmem>>, %arg3: memref<1x128xf32, #tpu.memory_space<vmem>>, %arg4: memref<2x128xf32, #tpu.memory_space<vmem>>) attributes {dimension_semantics = [#tpu.dimension_semantics<parallel>], iteration_bounds = array<i64: 1>, scalar_prefetch = 0 : i64, scratch_operands = 0 : i64, tpu.core_type = #tpu.core_type<tc>, window_params = [{transform_indices = @transform_0, window_bounds = array<i64: 2, 256>}, {pipeline_mode = #tpu.pipeline_mode<synchronous>, transform_indices = @transform_1, window_bounds = array<i64: 256, 128>}, {pipeline_mode = #tpu.pipeline_mode<synchronous>, transform_indices = @transform_2, window_bounds = array<i64: 1, 128>}, {transform_indices = @transform_3, window_bounds = array<i64: 2, 128>}]} {
    %c0 = arith.constant 0 : index
    %c0_0 = arith.constant 0 : index
    %0 = vector.load %arg1[%c0, %c0_0] : memref<2x256xf32, #tpu.memory_space<vmem>>, vector<2x256xf32>
    %c0_1 = arith.constant 0 : index
    %c0_2 = arith.constant 0 : index
    %1 = vector.load %arg2[%c0_1, %c0_2] : memref<256x128xf32, #tpu.memory_space<vmem>>, vector<256x128xf32>
    %cst = arith.constant dense<0.000000e+00> : vector<2x128xf32>
    %2 = tpu.matmul %0, %1, %cst {dimension_numbers = #tpu.dot_dimension_numbers<[1], [0], [0], [1], [0, 0, 1, 1], [], []>} : vector<2x256xf32>, vector<256x128xf32>, vector<2x128xf32> -> vector<2x128xf32>
    %c0_3 = arith.constant 0 : index
    %c0_4 = arith.constant 0 : index
    %3 = vector.load %arg3[%c0_3, %c0_4] : memref<1x128xf32, #tpu.memory_space<vmem>>, vector<1x128xf32>
    %4 = vector.broadcast %3 : vector<1x128xf32> to vector<2x128xf32>
    %5 = arith.addf %2, %4 : vector<2x128xf32>
    %c0_5 = arith.constant 0 : index
    %c0_6 = arith.constant 0 : index
    %6 = vector.load %arg4[%c0_5, %c0_6] : memref<2x128xf32, #tpu.memory_space<vmem>>, vector<2x128xf32>
    tpu.vector_store %arg4[%c0_5, %c0_6], %5 {strides = array<i32>} : memref<2x128xf32, #tpu.memory_space<vmem>>, vector<2x128xf32>,
    return
  }
  func.func @transform_0(%arg0: i32) -> (i32, i32) {
    %c0_i32 = arith.constant 0 : i32
    %c0_i32_0 = arith.constant 0 : i32
    return %arg0, %c0_i32 : i32, i32
  }
  func.func @transform_1(%arg0: i32) -> (i32, i32) {
    %c0_i32 = arith.constant 0 : i32
    %c0_i32_0 = arith.constant 0 : i32
    %c0_i32_1 = arith.constant 0 : i32
    return %c0_i32, %c0_i32_0 : i32, i32
  }
  func.func @transform_2(%arg0: i32) -> (i32, i32) {
    %c0_i32 = arith.constant 0 : i32
    %c0_i32_0 = arith.constant 0 : i32
    %c0_i32_1 = arith.constant 0 : i32
    return %c0_i32, %c0_i32_0 : i32, i32
  }
  func.func @transform_3(%arg0: i32) -> (i32, i32) {
    %c0_i32 = arith.constant 0 : i32
    %c0_i32_0 = arith.constant 0 : i32
    return %arg0, %c0_i32 : i32, i32
  }
}

</mosaic_0001>

<llo_original>
// kernel: _decoder_ctc_pallas.1
$region0: #{_decoder_ctc_pallas.1}
  #allocation0 [shape = 'u32[]', space=smem, size = 0x4, offset = 0x4, fixed_abs, tag = 'smem constant byte address 0x4 - core index']
  #allocation1 [shape = 'u32[144,128]{1,0:T(1,128)}', space=vmem, size = 0x12000, scoped, tag = 'internal scratch']
  %s0 = inlined_call_operand.vmem [shape: f32[2,256], index: 0, kind: input, shape index: {}]
  %s1 = inlined_call_operand.hbm [shape: f32[256,128], index: 1, kind: input, shape index: {}]
  %s2 = inlined_call_operand.vmem [shape: f32[1,128], index: 2, kind: input, shape index: {}]
  %s3 = inlined_call_operand.vmem [shape: f32[2,128], index: 3, kind: output, shape index: {}]
  %s4 = sld [smem:[#allocation0]]
  $region26: #{_decoder_ctc_pallas.1} parent=0
    _
  %s6 = ssub.s32 1, %s4
  %s7 = scalar_select 0, %s6, %s4
  $region1: #{_decoder_ctc_pallas.1} parent=0
    #allocation2 [shape = 'u8[131072]{0}', space=vmem, size = 0x20000, scoped, tag = 'input window, operand 1, single buffered']
    #allocation3 [shape = 's32[1]{0}', space=sflag, size = 0x4, scoped, tag = 'scoped memory for _decoder_ctc_pallas.1']
    %8 = vsyncpa [#allocation3], 0
    // Predicated region
    $region2: #{_decoder_ctc_pallas.1} parent=1 // pred_check
      _
    $region3: #{_decoder_ctc_pallas.1} parent=1 // pred_check_branch
      %10 = sbr.rel (0) target = $region5
    $region4: #{_decoder_ctc_pallas.1} parent=1 // pred_region
      _
    $region5: #{_decoder_ctc_pallas.1} parent=1 // pred_fallthru
      _
    // Predicated region
    $region6: #{_decoder_ctc_pallas.1} parent=1 // pred_check
      _
    $region7: #{_decoder_ctc_pallas.1} parent=1 // pred_check_branch
      %12 = sbr.rel (0) target = $region9
    $region8: #{_decoder_ctc_pallas.1} parent=1 // pred_region
      %s14 = ssub.s32 4096, 4096
      %15 = vsyncadd [#allocation3], %s14
      %s16 = sshll.u32 [#allocation2], 4
      %s17 = int_to_ptr.vmem [resolvable:$true] %s16
      %22 = dma.hbm_to_vmem [thread:$0]  %s1, 4096, %s17, [#allocation3], 128, 128, 8
    $region9: #{_decoder_ctc_pallas.1} parent=1 // pred_fallthru
      _
    // Predicated region
    $region10: #{_decoder_ctc_pallas.1} parent=1 // pred_check
      _
    $region11: #{_decoder_ctc_pallas.1} parent=1 // pred_check_branch
      %24 = sbr.rel (0) target = $region13
    $region12: #{_decoder_ctc_pallas.1} parent=1 // pred_region
      _
    $region13: #{_decoder_ctc_pallas.1} parent=1 // pred_fallthru
      _
    // Predicated region
    $region14: #{_decoder_ctc_pallas.1} parent=1 // pred_check
      _
    $region15: #{_decoder_ctc_pallas.1} parent=1 // pred_check_branch
      %26 = sbr.rel (0) target = $region17
    $region16: #{_decoder_ctc_pallas.1} parent=1 // pred_region
      %27 = dma.done [#allocation3], 4096
    $region17: #{_decoder_ctc_pallas.1} parent=1 // pred_fallthru
      _
    %v28 = vld [vmem:[%s0] sm:$0xf]
    %v29 = vld [vmem:[#allocation2] sm:$0xff]
    %v30 = vld [vmem:[#allocation2 + $0x8] sm:$0xff]
    %v31 = vld [vmem:[#allocation2 + $0x10] sm:$0xff]
    %v32 = vld [vmem:[#allocation2 + $0x18] sm:$0xff]
    %v33 = vld [vmem:[#allocation2 + $0x20] sm:$0xff]
    %v34 = vld [vmem:[#allocation2 + $0x28] sm:$0xff]
    %v35 = vld [vmem:[#allocation2 + $0x30] sm:$0xff]
    %v36 = vld [vmem:[#allocation2 + $0x38] sm:$0xff]
    %v37 = vld [vmem:[#allocation2 + $0x40] sm:$0xff]
    %v38 = vld [vmem:[#allocation2 + $0x48] sm:$0xff]
    %v39 = vld [vmem:[#allocation2 + $0x50] sm:$0xff]
    %v40 = vld [vmem:[#allocation2 + $0x58] sm:$0xff]
    %v41 = vld [vmem:[#allocation2 + $0x60] sm:$0xff]
    %v42 = vld [vmem:[#allocation2 + $0x68] sm:$0xff]
    %v43 = vld [vmem:[#allocation2 + $0x70] sm:$0xff]
    %v44 = vld [vmem:[#allocation2 + $0x78] sm:$0xff]
    %v45 = vld [vmem:[#allocation2 + $0x80] sm:$0xff]
    %v46 = vld [vmem:[#allocation2 + $0x88] sm:$0xff]
    %v47 = vld [vmem:[#allocation2 + $0x90] sm:$0xff]
    %v48 = vld [vmem:[#allocation2 + $0x98] sm:$0xff]
    %v49 = vld [vmem:[#allocation2 + $0xa0] sm:$0xff]
    %v50 = vld [vmem:[#allocation2 + $0xa8] sm:$0xff]
    %v51 = vld [vmem:[#allocation2 + $0xb0] sm:$0xff]
    %v52 = vld [vmem:[#allocation2 + $0xb8] sm:$0xff]
    %v53 = vld [vmem:[#allocation2 + $0xc0] sm:$0xff]
    %v54 = vld [vmem:[#allocation2 + $0xc8] sm:$0xff]
    %v55 = vld [vmem:[#allocation2 + $0xd0] sm:$0xff]
    %v56 = vld [vmem:[#allocation2 + $0xd8] sm:$0xff]
    %v57 = vld [vmem:[#allocation2 + $0xe0] sm:$0xff]
    %v58 = vld [vmem:[#allocation2 + $0xe8] sm:$0xff]
    %v59 = vld [vmem:[#allocation2 + $0xf0] sm:$0xff]
    %v60 = vld [vmem:[#allocation2 + $0xf8] sm:$0xff]
    %v61 = vld [vmem:[%s2] sm:$0x1]
    %v63 = vlaneseq
    %v64 = vshrl.u32 %v63, 7
    %v65 = vsub.s32 0, %v64
    %v66 = vrot.slane %v61, %v65
    %v70 = vunpack.c.l.s4 1983009808
    %v71 = vunpack.c.0.s8 %v70
    %v72 = vlaneseq
    %v73 = vshrl.u32 %v72, 7
    %v74 = vsub.s32 %v71, %v73
    %v75 = vrot.slane %v28, %v74
    %v76 = vcombine.high %v75, %v75
    %79 = vmatprep.subr.mxu0 0.0
    %80 = vmatpush1.msra.mxu0 %v29
    %81 = vmatprep.subr.mxu0 0.0
    %82 = vmatpush1.msra.mxu0 %v30
    %83 = vmatprep.subr.mxu0 0.0
    %84 = vmatpush1.msra.mxu0 %v31
    %85 = vmatprep.subr.mxu0 0.0
    %86 = vmatpush1.msra.mxu0 %v32
    %87 = vmatprep.subr.mxu0 0.0
    %88 = vmatpush1.msra.mxu0 %v33
    %89 = vmatprep.subr.mxu0 0.0
    %90 = vmatpush1.msra.mxu0 %v34
    %91 = vmatprep.subr.mxu0 0.0
    %92 = vmatpush1.msra.mxu0 %v35
    %93 = vmatprep.subr.mxu0 0.0
    %94 = vmatpush1.msra.mxu0 %v36
    %95 = vmatprep.subr.mxu0 0.0
    %96 = vmatpush1.msra.mxu0 %v37
    %97 = vmatprep.subr.mxu0 0.0
    %98 = vmatpush1.msra.mxu0 %v38
    %99 = vmatprep.subr.mxu0 0.0
    %100 = vmatpush1.msra.mxu0 %v39
    %101 = vmatprep.subr.mxu0 0.0
    %102 = vmatpush1.msra.mxu0 %v40
    %103 = vmatprep.subr.mxu0 0.0
    %104 = vmatpush1.msra.mxu0 %v41
    %105 = vmatprep.subr.mxu0 0.0
    %106 = vmatpush1.msra.mxu0 %v42
    %107 = vmatprep.subr.mxu0 0.0
    %108 = vmatpush1.msra.mxu0 %v43
    %109 = vmatprep.subr.mxu0 0.0
    %110 = vmatpush1.msra.mxu0 %v44
    %111 = vmatprep.subr.mxu0 0.0
    %112 = vmatpush1.msra.mxu0 %v45
    %113 = vmatprep.subr.mxu0 0.0
    %114 = vmatpush1.msra.mxu0 %v46
    %115 = vmatprep.subr.mxu0 0.0
    %116 = vmatpush1.msra.mxu0 %v47
    %117 = vmatprep.subr.mxu0 0.0
    %118 = vmatpush1.msra.mxu0 %v48
    %119 = vmatprep.subr.mxu0 0.0
    %120 = vmatpush1.msra.mxu0 %v49
    %121 = vmatprep.subr.mxu0 0.0
    %122 = vmatpush1.msra.mxu0 %v50
    %123 = vmatprep.subr.mxu0 0.0
    %124 = vmatpush1.msra.mxu0 %v51
    %125 = vmatprep.subr.mxu0 0.0
    %126 = vmatpush1.msra.mxu0 %v52
    %127 = vmatprep.subr.mxu0 0.0
    %128 = vmatpush1.msra.mxu0 %v53
    %129 = vmatprep.subr.mxu0 0.0
    %130 = vmatpush1.msra.mxu0 %v54
    %131 = vmatprep.subr.mxu0 0.0
    %132 = vmatpush1.msra.mxu0 %v55
    %133 = vmatprep.subr.mxu0 0.0
    %134 = vmatpush1.msra.mxu0 %v56
    %135 = vmatprep.subr.mxu0 0.0
    %136 = vmatpush1.msra.mxu0 %v57
    %137 = vmatprep.subr.mxu0 0.0
    %138 = vmatpush1.msra.mxu0 %v58
    %139 = vmatprep.subr.mxu0 0.0
    %140 = vmatpush1.msra.mxu0 %v59
    %141 = vmatprep.subr.mxu0 0.0
    %142 = vmatpush1.msra.mxu0 %v60
    %143 = vmatprep.mubr.f32.mxu0 %v76
    %144 = vmatmul.mubr.f32.gmra.mrb[0].mxu0 %v75
    %v145 = vpop.f32.mrb[0].mxu0
    %v146 = vadd.f32 %v66, %v145
    %v147 = vpop.f32.mrb[0].mxu0
    %148 = vdwg.mxu0
    %149 = vst [vmem:[%s3] sm:$0x3] %v146
    // Predicated region
    $region18: #{_decoder_ctc_pallas.1} parent=1 // pred_check
      _
    $region19: #{_decoder_ctc_pallas.1} parent=1 // pred_check_branch
      %151 = sbr.rel (0) target = $region21
    $region20: #{_decoder_ctc_pallas.1} parent=1 // pred_region
      _
    $region21: #{_decoder_ctc_pallas.1} parent=1 // pred_fallthru
      _
    // Predicated region
    $region22: #{_decoder_ctc_pallas.1} parent=1 // pred_check
      _
    $region23: #{_decoder_ctc_pallas.1} parent=1 // pred_check_branch
      %153 = sbr.rel (0) target = $region25
    $region24: #{_decoder_ctc_pallas.1} parent=1 // pred_region
      _
    $region25: #{_decoder_ctc_pallas.1} parent=1 // pred_fallthru
      _
    %154 = vsyncpa [#allocation3], 1

</llo_original>
